<compile_context>
chip_gen: v5e
topology: v5e:2x2
jax: 0.10.0
libtpu: 0.0.40
codegen_flags: <defaults>
</compile_context>

<pallas_src>
import functools
import math

import jax
import jax.numpy as jnp
from jax.experimental import pallas as pl
from jax.experimental.pallas import tpu as pltpu

_INV_SQRT2 = 1.0 / math.sqrt(2.0)


def _round_up(x, m):
    return ((x + m - 1) // m) * m


def _adapter_kernel(x_ref, wd_ref, bd_ref, wu_ref, bu_ref, o_ref, *, d_chunk):
    # x_ref:  (TM, D)   input row tile (native dtype, fed straight to the MXU)
    # wd_ref: (D, Bp)   down-projection weight (resident)
    # bd_ref: (1, Bp)   down-projection bias
    # wu_ref: (Bp, D)   up-projection weight (resident)
    # bu_ref: (1, D)    up-projection bias
    d = o_ref.shape[-1]

    # Down projection on the MXU; accumulate in f32.
    h = jnp.dot(x_ref[...], wd_ref[...], preferred_element_type=jnp.float32)
    h = h + bd_ref[...].astype(jnp.float32)

    # Exact GELU (PyTorch nn.GELU default, approximate='none'), in f32 on the
    # small (TM, Bp) intermediate only.
    h = 0.5 * h * (1.0 + jax.lax.erf(h * _INV_SQRT2))

    # Cast once so bf16 weights take the bf16 MXU path; reuse across chunks.
    h = h.astype(wu_ref.dtype)

    # Up projection, chunked over D so only a (TM, d_chunk) f32 temporary
    # exists at a time (no full (TM, D) f32 staging buffer).  Static Python
    # loop -> unrolled; chunk boundaries are 128-aligned when D >= 128.
    for c0 in range(0, d, d_chunk):
        c1 = min(c0 + d_chunk, d)
        y = jnp.dot(h, wu_ref[:, c0:c1], preferred_element_type=jnp.float32)
        y = y + bu_ref[:, c0:c1].astype(jnp.float32)
        o_ref[:, c0:c1] = y.astype(o_ref.dtype)


def _vmem_budget():
    """Returns (vmem_limit_bytes, headroom_factor)."""
    try:
        cap = int(pltpu.get_tpu_info().vmem_capacity_bytes)
    except Exception:
        cap = 64 * 1024 * 1024
    # Leave ~12 MiB below physical VMEM for compiler-internal scratch /
    # reserved regions; never request more than 96 MiB.
    limit = max(32 * 1024 * 1024, min(cap - 12 * 1024 * 1024, 96 * 1024 * 1024))
    # Looser tiling headroom on 128 MiB parts (v5e/v6e), tight on v7x (64 MiB).
    headroom = 0.75 if cap >= 128 * 1024 * 1024 else 0.6
    return limit, headroom


def _auto_tile_m(d, bneck_p, x_dtype, w_dtype, d_chunk, vmem_limit, headroom):
    """Largest row tile whose double-buffered x/out tiles (plus single-buffered
    resident weights and f32 intermediates) fit in the scoped VMEM budget."""
    x_item = jnp.dtype(x_dtype).itemsize
    w_item = jnp.dtype(w_dtype).itemsize
    per_row = (2 * d * x_item          # x tile, double buffered
               + 2 * d * x_item        # out tile, double buffered
               + 4 * bneck_p           # f32 h intermediate
               + w_item * bneck_p      # h cast to weight dtype
               + 4 * d_chunk)          # f32 y chunk (not full D)
    # Resident weights/biases are single-buffered.
    const = w_item * (d * bneck_p + bneck_p + bneck_p * d + d)
    budget = int(headroom * vmem_limit)
    if d <= 1024:
        candidates = (4096, 2048, 1024, 768, 512, 384, 256, 128)
    else:
        candidates = (1024, 768, 512, 384, 256, 128)
    for cand in candidates:
        if const + cand * per_row <= budget:
            return cand
    return 128


def houlsby_adapter(x, w_down, b_down, w_up, b_up, *, tile_m=None):
    """Apply the Houlsby adapter along the last axis of x.

    x:       (..., D)
    w_down:  (D, bottleneck)
    b_down:  (bottleneck,)
    w_up:    (bottleneck, D)
    b_up:    (D,)
    """
    orig_shape = x.shape
    d = orig_shape[-1]
    bneck = w_down.shape[1]
    x2 = x.reshape(-1, d)            # metadata-only flatten of contiguous x
    n = x2.shape[0]

    # Lane-pad the bottleneck so the (TM, bneck) intermediate is lane-dense.
    # Exact: padded columns of h are gelu(0 + 0) = 0, padded w_up rows are 0.
    # (Kept at 128, not 256: kernel is HBM-bound; wider pad only adds bytes.)
    bneck_p = _round_up(bneck, 128)
    if bneck_p != bneck:
        w_down = jnp.pad(w_down, ((0, 0), (0, bneck_p - bneck)))
        b_down = jnp.pad(b_down, ((0, bneck_p - bneck),))
        w_up = jnp.pad(w_up, ((0, bneck_p - bneck), (0, 0)))
    bd2 = b_down.reshape(1, bneck_p)
    bu2 = b_up.reshape(1, d)

    d_chunk = d if d <= 512 else 512   # lane-aligned up-projection chunk

    vmem_limit, headroom = _vmem_budget()
    x_item = jnp.dtype(x.dtype).itemsize
    w_item = jnp.dtype(w_down.dtype).itemsize
    sub = max(8, 32 // x_item)         # sublane packing: 8 f32, 16 bf16, 32 int8
    if tile_m is None:
        tile_m = _auto_tile_m(d, bneck_p, x.dtype, w_down.dtype, d_chunk,
                              vmem_limit, headroom)
    # Sublane-align the tile and never exceed the (rounded-up) row count.
    tile_m = min(_round_up(tile_m, sub), _round_up(n, sub))
    tile_m = max(tile_m, sub)
    # v7x megacore: guarantee >= 2 grid blocks when there is enough work so
    # both TensorCores get a share of the (parallel) row axis.
    if n >= 256:
        tile_m = min(tile_m, _round_up(-(-n // 2), sub))

    # Ragged last block (when tile_m does not divide n) is handled by Pallas:
    # OOB reads compute garbage rows, OOB writes are dropped; each output row
    # depends only on its own input row, so valid rows are unaffected.
    grid = (pl.cdiv(n, tile_m),)

    cost = pl.CostEstimate(
        flops=4 * n * d * bneck_p,
        transcendentals=n * bneck_p,
        bytes_accessed=2 * n * d * x_item
        + w_item * (2 * d * bneck_p + bneck_p + d),
    )

    def _run(single_buffer_weights):
        # Constant index_map -> block never changes; single-buffer to halve
        # its VMEM footprint when supported.
        resident = ({"pipeline_mode": pl.Buffered(1)}
                    if single_buffer_weights else {})
        return pl.pallas_call(
            functools.partial(_adapter_kernel, d_chunk=d_chunk),
            out_shape=jax.ShapeDtypeStruct((n, d), x.dtype),
            grid_spec=pltpu.PrefetchScalarGridSpec(
                num_scalar_prefetch=0,
                grid=grid,
                in_specs=[
                    pl.BlockSpec((tile_m, d), lambda i: (i, 0)),              # x rows
                    pl.BlockSpec((d, bneck_p), lambda i: (0, 0), **resident),  # w_down
                    pl.BlockSpec((1, bneck_p), lambda i: (0, 0), **resident),  # b_down
                    pl.BlockSpec((bneck_p, d), lambda i: (0, 0), **resident),  # w_up
                    pl.BlockSpec((1, d), lambda i: (0, 0), **resident),        # b_up
                ],
                out_specs=pl.BlockSpec((tile_m, d), lambda i: (i, 0)),
            ),
            compiler_params=pltpu.CompilerParams(
                dimension_semantics=("parallel",),
                vmem_limit_bytes=vmem_limit,
            ),
            cost_estimate=cost,
        )(x2, w_down, bd2, w_up, bu2)

    try:
        out = _run(single_buffer_weights=True)
    except Exception:
        # Fallback if this JAX build rejects pipeline_mode=pl.Buffered(1).
        out = _run(single_buffer_weights=False)

    return out.reshape(orig_shape)


def init_params(key, input_size, bottleneck, dtype=jnp.float32):
    """Deterministic init mimicking nn.Linear defaults (uniform +/- 1/sqrt(fan_in))."""
    k1, k2, k3, k4 = jax.random.split(key, 4)
    lim_down = 1.0 / math.sqrt(input_size)
    lim_up = 1.0 / math.sqrt(bottleneck)
    w_down = jax.random.uniform(k1, (input_size, bottleneck), dtype,
                                minval=-lim_down, maxval=lim_down)
    b_down = jax.random.uniform(k2, (bottleneck,), dtype,
                                minval=-lim_down, maxval=lim_down)
    w_up = jax.random.uniform(k3, (bottleneck, input_size), dtype,
                              minval=-lim_up, maxval=lim_up)
    b_up = jax.random.uniform(k4, (input_size,), dtype,
                              minval=-lim_up, maxval=lim_up)
    return w_down, b_down, w_up, b_up


if __name__ == "__main__":
    key = jax.random.PRNGKey(0)
    k_x, k_p = jax.random.split(key)

    batch, seq, hidden, bottleneck = 2, 8, 32, 8
    x = jax.random.normal(k_x, (batch, seq, hidden), jnp.float32)
    w_down, b_down, w_up, b_up = init_params(k_p, hidden, bottleneck)

    y = houlsby_adapter(x, w_down, b_down, w_up, b_up)
    y = jax.block_until_ready(y)

    # Pure-JAX reference (exact GELU, matching nn.GELU(approximate='none')).
    h_ref = x @ w_down + b_down
    h_ref = 0.5 * h_ref * (1.0 + jax.lax.erf(h_ref / math.sqrt(2.0)))
    y_ref = h_ref @ w_up + b_up

    assert y.shape == x.shape
    assert jnp.allclose(y, y_ref, atol=1e-4, rtol=1e-4), "mismatch vs reference"
    print("KERNEL_OK")
</pallas_src>

<mosaic_0001>
module attributes {stable_mosaic.version = 11 : i64} {
  func.func @_adapter_kernel(%arg0: i32, %arg1: memref<16x32xf32, #tpu.memory_space<vmem>>, %arg2: memref<32x128xf32, #tpu.memory_space<vmem>>, %arg3: memref<1x128xf32, #tpu.memory_space<vmem>>, %arg4: memref<128x32xf32, #tpu.memory_space<vmem>>, %arg5: memref<1x32xf32, #tpu.memory_space<vmem>>, %arg6: memref<16x32xf32, #tpu.memory_space<vmem>>) attributes {dimension_semantics = [#tpu.dimension_semantics<parallel>], iteration_bounds = array<i64: 1>, scalar_prefetch = 0 : i64, scratch_operands = 0 : i64, tpu.core_type = #tpu.core_type<tc>, window_params = [{transform_indices = @transform_0, window_bounds = array<i64: 16, 32>}, {pipeline_mode = #tpu.pipeline_mode<synchronous>, transform_indices = @transform_1, window_bounds = array<i64: 32, 128>}, {pipeline_mode = #tpu.pipeline_mode<synchronous>, transform_indices = @transform_2, window_bounds = array<i64: 1, 128>}, {pipeline_mode = #tpu.pipeline_mode<synchronous>, transform_indices = @transform_3, window_bounds = array<i64: 128, 32>}, {pipeline_mode = #tpu.pipeline_mode<synchronous>, transform_indices = @transform_4, window_bounds = array<i64: 1, 32>}, {transform_indices = @transform_5, window_bounds = array<i64: 16, 32>}]} {
    %c0 = arith.constant 0 : index
    %c0_0 = arith.constant 0 : index
    %0 = vector.load %arg1[%c0, %c0_0] : memref<16x32xf32, #tpu.memory_space<vmem>>, vector<16x32xf32>
    %c0_1 = arith.constant 0 : index
    %c0_2 = arith.constant 0 : index
    %1 = vector.load %arg2[%c0_1, %c0_2] : memref<32x128xf32, #tpu.memory_space<vmem>>, vector<32x128xf32>
    %cst = arith.constant dense<0.000000e+00> : vector<16x128xf32>
    %2 = tpu.matmul %0, %1, %cst {dimension_numbers = #tpu.dot_dimension_numbers<[1], [0], [0], [1], [0, 0, 1, 1], [], []>} : vector<16x32xf32>, vector<32x128xf32>, vector<16x128xf32> -> vector<16x128xf32>
    %c0_3 = arith.constant 0 : index
    %c0_4 = arith.constant 0 : index
    %3 = vector.load %arg3[%c0_3, %c0_4] : memref<1x128xf32, #tpu.memory_space<vmem>>, vector<1x128xf32>
    %4 = vector.broadcast %3 : vector<1x128xf32> to vector<16x128xf32>
    %5 = arith.addf %2, %4 : vector<16x128xf32>
    %cst_5 = arith.constant 5.000000e-01 : f32
    %6 = vector.broadcast %cst_5 : f32 to vector<16x128xf32>
    %7 = arith.mulf %6, %5 : vector<16x128xf32>
    %cst_6 = arith.constant 0.707106769 : f32
    %8 = vector.broadcast %cst_6 : f32 to vector<16x128xf32>
    %9 = arith.mulf %5, %8 : vector<16x128xf32>
    %10 = math.erf %9 : vector<16x128xf32>
    %cst_7 = arith.constant 1.000000e+00 : f32
    %11 = vector.broadcast %cst_7 : f32 to vector<16x128xf32>
    %12 = arith.addf %11, %10 : vector<16x128xf32>
    %13 = arith.mulf %7, %12 : vector<16x128xf32>
    %c0_8 = arith.constant 0 : index
    %c0_9 = arith.constant 0 : index
    %14 = vector.load %arg4[%c0_8, %c0_9] : memref<128x32xf32, #tpu.memory_space<vmem>>, vector<128x32xf32>
    %cst_10 = arith.constant dense<0.000000e+00> : vector<16x32xf32>
    %15 = tpu.matmul %13, %14, %cst_10 {dimension_numbers = #tpu.dot_dimension_numbers<[1], [0], [0], [1], [0, 0, 1, 1], [], []>} : vector<16x128xf32>, vector<128x32xf32>, vector<16x32xf32> -> vector<16x32xf32>
    %c0_11 = arith.constant 0 : index
    %c0_12 = arith.constant 0 : index
    %16 = vector.load %arg5[%c0_11, %c0_12] : memref<1x32xf32, #tpu.memory_space<vmem>>, vector<1x32xf32>
    %17 = vector.broadcast %16 : vector<1x32xf32> to vector<16x32xf32>
    %18 = arith.addf %15, %17 : vector<16x32xf32>
    %c0_13 = arith.constant 0 : index
    %c0_14 = arith.constant 0 : index
    %19 = vector.load %arg6[%c0_13, %c0_14] : memref<16x32xf32, #tpu.memory_space<vmem>>, vector<16x32xf32>
    tpu.vector_store %arg6[%c0_13, %c0_14], %18 {strides = array<i32>} : memref<16x32xf32, #tpu.memory_space<vmem>>, vector<16x32xf32>,
    return
  }
  func.func @transform_0(%arg0: i32) -> (i32, i32) {
    %c0_i32 = arith.constant 0 : i32
    %c0_i32_0 = arith.constant 0 : i32
    return %arg0, %c0_i32 : i32, i32
  }
  func.func @transform_1(%arg0: i32) -> (i32, i32) {
    %c0_i32 = arith.constant 0 : i32
    %c0_i32_0 = arith.constant 0 : i32
    %c0_i32_1 = arith.constant 0 : i32
    return %c0_i32, %c0_i32_0 : i32, i32
  }
  func.func @transform_2(%arg0: i32) -> (i32, i32) {
    %c0_i32 = arith.constant 0 : i32
    %c0_i32_0 = arith.constant 0 : i32
    %c0_i32_1 = arith.constant 0 : i32
    return %c0_i32, %c0_i32_0 : i32, i32
  }
  func.func @transform_3(%arg0: i32) -> (i32, i32) {
    %c0_i32 = arith.constant 0 : i32
    %c0_i32_0 = arith.constant 0 : i32
    %c0_i32_1 = arith.constant 0 : i32
    return %c0_i32, %c0_i32_0 : i32, i32
  }
  func.func @transform_4(%arg0: i32) -> (i32, i32) {
    %c0_i32 = arith.constant 0 : i32
    %c0_i32_0 = arith.constant 0 : i32
    %c0_i32_1 = arith.constant 0 : i32
    return %c0_i32, %c0_i32_0 : i32, i32
  }
  func.func @transform_5(%arg0: i32) -> (i32, i32) {
    %c0_i32 = arith.constant 0 : i32
    %c0_i32_0 = arith.constant 0 : i32
    return %arg0, %c0_i32 : i32, i32
  }
}

module attributes {stable_mosaic.version = 11 : i64} {
  func.func @_adapter_kernel(%arg0: i32, %arg1: memref<16x32xf32, #tpu.memory_space<vmem>>, %arg2: memref<32x128xf32, #tpu.memory_space<vmem>>, %arg3: memref<1x128xf32, #tpu.memory_space<vmem>>, %arg4: memref<128x32xf32, #tpu.memory_space<vmem>>, %arg5: memref<1x32xf32, #tpu.memory_space<vmem>>, %arg6: memref<16x32xf32, #tpu.memory_space<vmem>>) attributes {dimension_semantics = [#tpu.dimension_semantics<parallel>], iteration_bounds = array<i64: 1>, scalar_prefetch = 0 : i64, scratch_operands = 0 : i64, tpu.core_type = #tpu.core_type<tc>, window_params = [{transform_indices = @transform_0, window_bounds = array<i64: 16, 32>}, {pipeline_mode = #tpu.pipeline_mode<synchronous>, transform_indices = @transform_1, window_bounds = array<i64: 32, 128>}, {pipeline_mode = #tpu.pipeline_mode<synchronous>, transform_indices = @transform_2, window_bounds = array<i64: 1, 128>}, {pipeline_mode = #tpu.pipeline_mode<synchronous>, transform_indices = @transform_3, window_bounds = array<i64: 128, 32>}, {pipeline_mode = #tpu.pipeline_mode<synchronous>, transform_indices = @transform_4, window_bounds = array<i64: 1, 32>}, {transform_indices = @transform_5, window_bounds = array<i64: 16, 32>}]} {
    %c0 = arith.constant 0 : index
    %c0_0 = arith.constant 0 : index
    %0 = vector.load %arg1[%c0, %c0_0] : memref<16x32xf32, #tpu.memory_space<vmem>>, vector<16x32xf32>
    %c0_1 = arith.constant 0 : index
    %c0_2 = arith.constant 0 : index
    %1 = vector.load %arg2[%c0_1, %c0_2] : memref<32x128xf32, #tpu.memory_space<vmem>>, vector<32x128xf32>
    %cst = arith.constant dense<0.000000e+00> : vector<16x128xf32>
    %2 = tpu.matmul %0, %1, %cst {dimension_numbers = #tpu.dot_dimension_numbers<[1], [0], [0], [1], [0, 0, 1, 1], [], []>} : vector<16x32xf32>, vector<32x128xf32>, vector<16x128xf32> -> vector<16x128xf32>
    %c0_3 = arith.constant 0 : index
    %c0_4 = arith.constant 0 : index
    %3 = vector.load %arg3[%c0_3, %c0_4] : memref<1x128xf32, #tpu.memory_space<vmem>>, vector<1x128xf32>
    %4 = vector.broadcast %3 : vector<1x128xf32> to vector<16x128xf32>
    %5 = arith.addf %2, %4 : vector<16x128xf32>
    %cst_5 = arith.constant 5.000000e-01 : f32
    %6 = vector.broadcast %cst_5 : f32 to vector<16x128xf32>
    %7 = arith.mulf %6, %5 : vector<16x128xf32>
    %cst_6 = arith.constant 0.707106769 : f32
    %8 = vector.broadcast %cst_6 : f32 to vector<16x128xf32>
    %9 = arith.mulf %5, %8 : vector<16x128xf32>
    %10 = math.erf %9 : vector<16x128xf32>
    %cst_7 = arith.constant 1.000000e+00 : f32
    %11 = vector.broadcast %cst_7 : f32 to vector<16x128xf32>
    %12 = arith.addf %11, %10 : vector<16x128xf32>
    %13 = arith.mulf %7, %12 : vector<16x128xf32>
    %c0_8 = arith.constant 0 : index
    %c0_9 = arith.constant 0 : index
    %14 = vector.load %arg4[%c0_8, %c0_9] : memref<128x32xf32, #tpu.memory_space<vmem>>, vector<128x32xf32>
    %cst_10 = arith.constant dense<0.000000e+00> : vector<16x32xf32>
    %15 = tpu.matmul %13, %14, %cst_10 {dimension_numbers = #tpu.dot_dimension_numbers<[1], [0], [0], [1], [0, 0, 1, 1], [], []>} : vector<16x128xf32>, vector<128x32xf32>, vector<16x32xf32> -> vector<16x32xf32>
    %c0_11 = arith.constant 0 : index
    %c0_12 = arith.constant 0 : index
    %16 = vector.load %arg5[%c0_11, %c0_12] : memref<1x32xf32, #tpu.memory_space<vmem>>, vector<1x32xf32>
    %17 = vector.broadcast %16 : vector<1x32xf32> to vector<16x32xf32>
    %18 = arith.addf %15, %17 : vector<16x32xf32>
    %c0_13 = arith.constant 0 : index
    %c0_14 = arith.constant 0 : index
    %19 = vector.load %arg6[%c0_13, %c0_14] : memref<16x32xf32, #tpu.memory_space<vmem>>, vector<16x32xf32>
    tpu.vector_store %arg6[%c0_13, %c0_14], %18 {strides = array<i32>} : memref<16x32xf32, #tpu.memory_space<vmem>>, vector<16x32xf32>,
    return
  }
  func.func @transform_0(%arg0: i32) -> (i32, i32) {
    %c0_i32 = arith.constant 0 : i32
    %c0_i32_0 = arith.constant 0 : i32
    return %arg0, %c0_i32 : i32, i32
  }
  func.func @transform_1(%arg0: i32) -> (i32, i32) {
    %c0_i32 = arith.constant 0 : i32
    %c0_i32_0 = arith.constant 0 : i32
    %c0_i32_1 = arith.constant 0 : i32
    return %c0_i32, %c0_i32_0 : i32, i32
  }
  func.func @transform_2(%arg0: i32) -> (i32, i32) {
    %c0_i32 = arith.constant 0 : i32
    %c0_i32_0 = arith.constant 0 : i32
    %c0_i32_1 = arith.constant 0 : i32
    return %c0_i32, %c0_i32_0 : i32, i32
  }
  func.func @transform_3(%arg0: i32) -> (i32, i32) {
    %c0_i32 = arith.constant 0 : i32
    %c0_i32_0 = arith.constant 0 : i32
    %c0_i32_1 = arith.constant 0 : i32
    return %c0_i32, %c0_i32_0 : i32, i32
  }
  func.func @transform_4(%arg0: i32) -> (i32, i32) {
    %c0_i32 = arith.constant 0 : i32
    %c0_i32_0 = arith.constant 0 : i32
    %c0_i32_1 = arith.constant 0 : i32
    return %c0_i32, %c0_i32_0 : i32, i32
  }
  func.func @transform_5(%arg0: i32) -> (i32, i32) {
    %c0_i32 = arith.constant 0 : i32
    %c0_i32_0 = arith.constant 0 : i32
    return %arg0, %c0_i32 : i32, i32
  }
}

</mosaic_0001>

<llo_original>
// kernel: tpu_custom_call.1
$region0: #{tpu_custom_call.1}
  #allocation0 [shape = 'u32[]', space=smem, size = 0x4, offset = 0x4, fixed_abs, tag = 'smem constant byte address 0x4 - core index']
  #allocation1 [shape = 'u32[72,128]{1,0:T(1,128)}', space=vmem, size = 0x9000, scoped, tag = 'internal scratch']
  %s0 = inlined_call_operand.vmem [shape: f32[16,32], index: 0, kind: input, shape index: {}]
  %s1 = inlined_call_operand.vmem [shape: f32[32,128], index: 1, kind: input, shape index: {}]
  %s2 = inlined_call_operand.vmem [shape: f32[1,128], index: 2, kind: input, shape index: {}]
  %s3 = inlined_call_operand.vmem [shape: f32[128,32], index: 3, kind: input, shape index: {}]
  %s4 = inlined_call_operand.vmem [shape: f32[1,32], index: 4, kind: input, shape index: {}]
  %s5 = inlined_call_operand.hbm [shape: f32[16,32], index: 5, kind: output, shape index: {}]
  %s6 = sld [smem:[#allocation0]]
  $region30: #{tpu_custom_call.1} parent=0
    _
  %s8 = ssub.s32 1, %s6
  %s9 = scalar_select 0, %s8, %s6
  $region1: #{tpu_custom_call.1} parent=0
    #allocation2 [shape = 'u8[8192]{0}', space=vmem, size = 0x2000, scoped, tag = 'output window, operand 0, single buffered']
    #allocation3 [shape = 's32[1]{0}', space=sflag, size = 0x4, scoped, tag = 'scoped memory for tpu_custom_call.1']
    %10 = vsyncpa [#allocation3], 0
    // Predicated region
    $region2: #{tpu_custom_call.1} parent=1 // pred_check
      _
    $region3: #{tpu_custom_call.1} parent=1 // pred_check_branch
      %12 = sbr.rel (0) target = $region5
    $region4: #{tpu_custom_call.1} parent=1 // pred_region
      _
    $region5: #{tpu_custom_call.1} parent=1 // pred_fallthru
      _
    // Predicated region
    $region6: #{tpu_custom_call.1} parent=1 // pred_check
      _
    $region7: #{tpu_custom_call.1} parent=1 // pred_check_branch
      %14 = sbr.rel (0) target = $region9
    $region8: #{tpu_custom_call.1} parent=1 // pred_region
      _
    $region9: #{tpu_custom_call.1} parent=1 // pred_fallthru
      _
    // Predicated region
    $region10: #{tpu_custom_call.1} parent=1 // pred_check
      _
    $region11: #{tpu_custom_call.1} parent=1 // pred_check_branch
      %16 = sbr.rel (0) target = $region13
    $region12: #{tpu_custom_call.1} parent=1 // pred_region
      _
    $region13: #{tpu_custom_call.1} parent=1 // pred_fallthru
      _
    // Predicated region
    $region14: #{tpu_custom_call.1} parent=1 // pred_check
      _
    $region15: #{tpu_custom_call.1} parent=1 // pred_check_branch
      %18 = sbr.rel (0) target = $region17
    $region16: #{tpu_custom_call.1} parent=1 // pred_region
      _
    $region17: #{tpu_custom_call.1} parent=1 // pred_fallthru
      _
    // Predicated region
    $region18: #{tpu_custom_call.1} parent=1 // pred_check
      _
    $region19: #{tpu_custom_call.1} parent=1 // pred_check_branch
      %20 = sbr.rel (0) target = $region21
    $region20: #{tpu_custom_call.1} parent=1 // pred_region
      _
    $region21: #{tpu_custom_call.1} parent=1 // pred_fallthru
      _
    %v21 = vld [vmem:[%s0] sm:$0xff]
    %v22 = vld [vmem:[%s0 + $0x8] sm:$0xff]
    %v23 = vld [vmem:[%s1] sm:$0xff]
    %v24 = vld [vmem:[%s1 + $0x8] sm:$0xff]
    %v25 = vld [vmem:[%s1 + $0x10] sm:$0xff]
    %v26 = vld [vmem:[%s1 + $0x18] sm:$0xff]
    %v27 = vld [vmem:[%s2] sm:$0x1]
    %v29 = vperm.slane %v27, 0
    %vm31 = vcmask 261120
    %v33 = vsel %vm31, %v21, 0
    %v36 = vsel %vm31, %v22, 0
    %38 = vmatpush.msra.mxu0 0.0
    %39 = vmatpush.msra.mxu0 0.0
    %40 = vmatpush.msra.mxu0 0.0
    %41 = vmatpush.msra.mxu0 0.0
    %42 = vmatpush.msra.mxu0 0.0
    %43 = vmatpush.msra.mxu0 0.0
    %44 = vmatpush.msra.mxu0 0.0
    %45 = vmatpush.msra.mxu0 0.0
    %46 = vmatpush.msra.mxu0 0.0
    %47 = vmatpush.msra.mxu0 0.0
    %48 = vmatpush.msra.mxu0 0.0
    %49 = vmatpush.msra.mxu0 0.0
    %50 = vmatpush.msra.mxu0 %v26
    %51 = vmatpush.msra.mxu0 %v25
    %52 = vmatpush.msra.mxu0 %v24
    %53 = vmatpush.msra.mxu0 %v23
    %54 = vmatmul.f32.gmra.mxu0 %v33
    %v55 = vpop.f32.mrf.mxu0
    %v56 = vadd.f32 %v29, %v55
    %57 = vmatmul.f32.gmra.mxu0 %v36
    %v58 = vpop.f32.mrf.mxu0
    %v59 = vadd.f32 %v29, %v58
    %60 = vdwg.mxu0
    %v61 = vmul.f32 %v56, 0.5
    %v62 = vmul.f32 %v59, 0.5
    %v63 = vmul.f32 %v56, 0.70710677
    %v64 = vmul.f32 %v59, 0.70710677
    %v65 = vmul.f32 %v63, %v63
    %v66 = vmin.f32 16.0, %v65
    %v67 = vmul.f32 %v66, 2.1237322e-06
    %v68 = vadd.f32 %v67, 0.00028619796
    %v69 = vmul.f32 %v66, %v68
    %v70 = vadd.f32 %v69, 0.0036580483
    %v71 = vmul.f32 %v66, %v70
    %v72 = vadd.f32 %v71, 0.05243302
    %v73 = vmul.f32 %v66, %v72
    %v74 = vadd.f32 %v73, 0.18741608
    %v75 = vmul.f32 %v66, %v74
    %v76 = vadd.f32 %v75, 1.1283791
    %v77 = vmul.f32 %v63, %v76
    %v78 = vmul.f32 %v66, 3.8918573e-05
    %v79 = vadd.f32 %v78, 0.001143296
    %v80 = vmul.f32 %v66, %v79
    %v81 = vadd.f32 %v80, 0.014752088
    %v82 = vmul.f32 %v66, %v81
    %v83 = vadd.f32 %v82, 0.112945676
    %v84 = vmul.f32 %v66, %v83
    %v85 = vadd.f32 %v84, 0.4994258
    %v86 = vmul.f32 %v66, %v85
    %v87 = vadd.f32 %v86, 1.0
    %v88 = vrcp.pop %v87
    %v89 = vmul.f32 %v87, %v88
    %v90 = vsub.f32 1.0, %v89
    %v91 = vmul.f32 %v88, %v90
    %v92 = vadd.f32 %v88, %v91
    %vm93 = vweird.f32 %v87
    %vm94 = vweird.f32 %v88
    %vm95 = vmor %vm93, %vm94
    %v96 = vsel %vm95, %v88, %v92
    %v97 = vand.u32 2147483647, %v87
    %vm98 = vcmp.eq.f32.partialorder %v97, 8.507059e+37
    %v99 = vand.u32 %v87, 2147483648
    %v100 = vor.u32 1.1754944e-38, %v99
    %v101 = vsel %vm98, %v100, %v96
    %v102 = vmul.f32 %v77, %v101
    %v103 = vmin.f32 %v102, 1.0
    %v104 = vmax.f32 %v103, -1.0
    %v105 = vmul.f32 %v64, %v64
    %v106 = vmin.f32 16.0, %v105
    %v107 = vmul.f32 %v106, 2.1237322e-06
    %v108 = vadd.f32 %v107, 0.00028619796
    %v109 = vmul.f32 %v106, %v108
    %v110 = vadd.f32 %v109, 0.0036580483
    %v111 = vmul.f32 %v106, %v110
    %v112 = vadd.f32 %v111, 0.05243302
    %v113 = vmul.f32 %v106, %v112
    %v114 = vadd.f32 %v113, 0.18741608
    %v115 = vmul.f32 %v106, %v114
    %v116 = vadd.f32 %v115, 1.1283791
    %v117 = vmul.f32 %v64, %v116
    %v118 = vmul.f32 %v106, 3.8918573e-05
    %v119 = vadd.f32 %v118, 0.001143296
    %v120 = vmul.f32 %v106, %v119
    %v121 = vadd.f32 %v120, 0.014752088
    %v122 = vmul.f32 %v106, %v121
    %v123 = vadd.f32 %v122, 0.112945676
    %v124 = vmul.f32 %v106, %v123
    %v125 = vadd.f32 %v124, 0.4994258
    %v126 = vmul.f32 %v106, %v125
    %v127 = vadd.f32 %v126, 1.0
    %v128 = vrcp.pop %v127
    %v129 = vmul.f32 %v127, %v128
    %v130 = vsub.f32 1.0, %v129
    %v131 = vmul.f32 %v128, %v130
    %v132 = vadd.f32 %v128, %v131
    %vm133 = vweird.f32 %v127
    %vm134 = vweird.f32 %v128
    %vm135 = vmor %vm133, %vm134
    %v136 = vsel %vm135, %v128, %v132
    %v137 = vand.u32 2147483647, %v127
    %vm138 = vcmp.eq.f32.partialorder %v137, 8.507059e+37
    %v139 = vand.u32 %v127, 2147483648
    %v140 = vor.u32 1.1754944e-38, %v139
    %v141 = vsel %vm138, %v140, %v136
    %v142 = vmul.f32 %v117, %v141
    %v143 = vmin.f32 %v142, 1.0
    %v144 = vmax.f32 %v143, -1.0
    %v145 = vadd.f32 %v104, 1.0
    %v146 = vadd.f32 %v144, 1.0
    %v147 = vmul.f32 %v61, %v145
    %v148 = vmul.f32 %v62, %v146
    %v149 = vld [vmem:[%s3] sm:$0xff]
    %v150 = vld [vmem:[%s3 + $0x8] sm:$0xff]
    %v151 = vld [vmem:[%s3 + $0x10] sm:$0xff]
    %v152 = vld [vmem:[%s3 + $0x18] sm:$0xff]
    %v153 = vld [vmem:[%s3 + $0x20] sm:$0xff]
    %v154 = vld [vmem:[%s3 + $0x28] sm:$0xff]
    %v155 = vld [vmem:[%s3 + $0x30] sm:$0xff]
    %v156 = vld [vmem:[%s3 + $0x38] sm:$0xff]
    %v157 = vld [vmem:[%s3 + $0x40] sm:$0xff]
    %v158 = vld [vmem:[%s3 + $0x48] sm:$0xff]
    %v159 = vld [vmem:[%s3 + $0x50] sm:$0xff]
    %v160 = vld [vmem:[%s3 + $0x58] sm:$0xff]
    %v161 = vld [vmem:[%s3 + $0x60] sm:$0xff]
    %v162 = vld [vmem:[%s3 + $0x68] sm:$0xff]
    %v163 = vld [vmem:[%s3 + $0x70] sm:$0xff]
    %v164 = vld [vmem:[%s3 + $0x78] sm:$0xff]
    %v165 = vld [vmem:[%s4] sm:$0x1]
    %v167 = vperm.slane %v165, 0
    %169 = vmatpush.msra.mxu0 %v164
    %170 = vmatpush.msra.mxu0 %v163
    %171 = vmatpush.msra.mxu0 %v162
    %172 = vmatpush.msra.mxu0 %v161
    %173 = vmatpush.msra.mxu0 %v160
    %174 = vmatpush.msra.mxu0 %v159
    %175 = vmatpush.msra.mxu0 %v158
    %176 = vmatpush.msra.mxu0 %v157
    %177 = vmatpush.msra.mxu0 %v156
    %178 = vmatpush.msra.mxu0 %v155
    %179 = vmatpush.msra.mxu0 %v154
    %180 = vmatpush.msra.mxu0 %v153
    %181 = vmatpush.msra.mxu0 %v152
    %182 = vmatpush.msra.mxu0 %v151
    %183 = vmatpush.msra.mxu0 %v150
    %184 = vmatpush.msra.mxu0 %v149
    %185 = vmatmul.f32.gmra.mxu0 %v147
    %v186 = vpop.f32.mrf.mxu0
    %v187 = vadd.f32 %v167, %v186
    %188 = vmatmul.f32.gmra.mxu0 %v148
    %v189 = vpop.f32.mrf.mxu0
    %v190 = vadd.f32 %v167, %v189
    %191 = vdwg.mxu0
    %192 = vst.msk [vmem:[#allocation2] sm:$0xff] %vm31, %v187
    %193 = vst.msk [vmem:[#allocation2 + $0x8] sm:$0xff] %vm31, %v190
    // Predicated region
    $region22: #{tpu_custom_call.1} parent=1 // pred_check
      _
    $region23: #{tpu_custom_call.1} parent=1 // pred_check_branch
      %195 = sbr.rel (0) target = $region25
    $region24: #{tpu_custom_call.1} parent=1 // pred_region
      %197 = vsyncadd [#allocation3], 0
      %s198 = sshll.u32 [#allocation2], 4
      %s199 = int_to_ptr.vmem [resolvable:$true] %s198
      %s200 = sshll.u32 %s5, 4
      %s201 = int_to_ptr.hbm [resolvable:$true] %s200
      %206 = dma.vmem_to_hbm [thread:$0]  %s199, 256, %s201, [#allocation3], 128, 128, 8
    $region25: #{tpu_custom_call.1} parent=1 // pred_fallthru
      _
    // Predicated region
    $region26: #{tpu_custom_call.1} parent=1 // pred_check
      _
    $region27: #{tpu_custom_call.1} parent=1 // pred_check_branch
      %208 = sbr.rel (0) target = $region29
    $region28: #{tpu_custom_call.1} parent=1 // pred_region
      %210 = dma.done [#allocation3], 256
    $region29: #{tpu_custom_call.1} parent=1 // pred_fallthru
      _
    %211 = vsyncpa [#allocation3], 1

// kernel: tpu_custom_call.1
$region0: #{tpu_custom_call.1}
  #allocation0 [shape = 'u32[]', space=smem, size = 0x4, offset = 0x4, fixed_abs, tag = 'smem constant byte address 0x4 - core index']
  #allocation1 [shape = 'u32[72,128]{1,0:T(1,128)}', space=vmem, size = 0x9000, scoped, tag = 'internal scratch']
  %s0 = inlined_call_operand.vmem [shape: f32[16,32], index: 0, kind: input, shape index: {}]
  %s1 = inlined_call_operand.vmem [shape: f32[32,128], index: 1, kind: input, shape index: {}]
  %s2 = inlined_call_operand.vmem [shape: f32[1,128], index: 2, kind: input, shape index: {}]
  %s3 = inlined_call_operand.vmem [shape: f32[128,32], index: 3, kind: input, shape index: {}]
  %s4 = inlined_call_operand.vmem [shape: f32[1,32], index: 4, kind: input, shape index: {}]
  %s5 = inlined_call_operand.hbm [shape: f32[16,32], index: 5, kind: output, shape index: {}]
  %s6 = sld [smem:[#allocation0]]
  $region30: #{tpu_custom_call.1} parent=0
    _
  %s8 = ssub.s32 1, %s6
  %s9 = scalar_select 0, %s8, %s6
  $region1: #{tpu_custom_call.1} parent=0
    #allocation2 [shape = 'u8[8192]{0}', space=vmem, size = 0x2000, scoped, tag = 'output window, operand 0, single buffered']
    #allocation3 [shape = 's32[1]{0}', space=sflag, size = 0x4, scoped, tag = 'scoped memory for tpu_custom_call.1']
    %10 = vsyncpa [#allocation3], 0
    // Predicated region
    $region2: #{tpu_custom_call.1} parent=1 // pred_check
      _
    $region3: #{tpu_custom_call.1} parent=1 // pred_check_branch
      %12 = sbr.rel (0) target = $region5
    $region4: #{tpu_custom_call.1} parent=1 // pred_region
      _
    $region5: #{tpu_custom_call.1} parent=1 // pred_fallthru
      _
    // Predicated region
    $region6: #{tpu_custom_call.1} parent=1 // pred_check
      _
    $region7: #{tpu_custom_call.1} parent=1 // pred_check_branch
      %14 = sbr.rel (0) target = $region9
    $region8: #{tpu_custom_call.1} parent=1 // pred_region
      _
    $region9: #{tpu_custom_call.1} parent=1 // pred_fallthru
      _
    // Predicated region
    $region10: #{tpu_custom_call.1} parent=1 // pred_check
      _
    $region11: #{tpu_custom_call.1} parent=1 // pred_check_branch
      %16 = sbr.rel (0) target = $region13
    $region12: #{tpu_custom_call.1} parent=1 // pred_region
      _
    $region13: #{tpu_custom_call.1} parent=1 // pred_fallthru
      _
    // Predicated region
    $region14: #{tpu_custom_call.1} parent=1 // pred_check
      _
    $region15: #{tpu_custom_call.1} parent=1 // pred_check_branch
      %18 = sbr.rel (0) target = $region17
    $region16: #{tpu_custom_call.1} parent=1 // pred_region
      _
    $region17: #{tpu_custom_call.1} parent=1 // pred_fallthru
      _
    // Predicated region
    $region18: #{tpu_custom_call.1} parent=1 // pred_check
      _
    $region19: #{tpu_custom_call.1} parent=1 // pred_check_branch
      %20 = sbr.rel (0) target = $region21
    $region20: #{tpu_custom_call.1} parent=1 // pred_region
      _
    $region21: #{tpu_custom_call.1} parent=1 // pred_fallthru
      _
    %v21 = vld [vmem:[%s0] sm:$0xff]
    %v22 = vld [vmem:[%s0 + $0x8] sm:$0xff]
    %v23 = vld [vmem:[%s1] sm:$0xff]
    %v24 = vld [vmem:[%s1 + $0x8] sm:$0xff]
    %v25 = vld [vmem:[%s1 + $0x10] sm:$0xff]
    %v26 = vld [vmem:[%s1 + $0x18] sm:$0xff]
    %v27 = vld [vmem:[%s2] sm:$0x1]
    %v29 = vperm.slane %v27, 0
    %vm31 = vcmask 261120
    %v33 = vsel %vm31, %v21, 0
    %v36 = vsel %vm31, %v22, 0
    %38 = vmatpush.msra.mxu0 0.0
    %39 = vmatpush.msra.mxu0 0.0
    %40 = vmatpush.msra.mxu0 0.0
    %41 = vmatpush.msra.mxu0 0.0
    %42 = vmatpush.msra.mxu0 0.0
    %43 = vmatpush.msra.mxu0 0.0
    %44 = vmatpush.msra.mxu0 0.0
    %45 = vmatpush.msra.mxu0 0.0
    %46 = vmatpush.msra.mxu0 0.0
    %47 = vmatpush.msra.mxu0 0.0
    %48 = vmatpush.msra.mxu0 0.0
    %49 = vmatpush.msra.mxu0 0.0
    %50 = vmatpush.msra.mxu0 %v26
    %51 = vmatpush.msra.mxu0 %v25
    %52 = vmatpush.msra.mxu0 %v24
    %53 = vmatpush.msra.mxu0 %v23
    %54 = vmatmul.f32.gmra.mxu0 %v33
    %v55 = vpop.f32.mrf.mxu0
    %v56 = vadd.f32 %v29, %v55
    %57 = vmatmul.f32.gmra.mxu0 %v36
    %v58 = vpop.f32.mrf.mxu0
    %v59 = vadd.f32 %v29, %v58
    %60 = vdwg.mxu0
    %v61 = vmul.f32 %v56, 0.5
    %v62 = vmul.f32 %v59, 0.5
    %v63 = vmul.f32 %v56, 0.70710677
    %v64 = vmul.f32 %v59, 0.70710677
    %v65 = vmul.f32 %v63, %v63
    %v66 = vmin.f32 16.0, %v65
    %v67 = vmul.f32 %v66, 2.1237322e-06
    %v68 = vadd.f32 %v67, 0.00028619796
    %v69 = vmul.f32 %v66, %v68
    %v70 = vadd.f32 %v69, 0.0036580483
    %v71 = vmul.f32 %v66, %v70
    %v72 = vadd.f32 %v71, 0.05243302
    %v73 = vmul.f32 %v66, %v72
    %v74 = vadd.f32 %v73, 0.18741608
    %v75 = vmul.f32 %v66, %v74
    %v76 = vadd.f32 %v75, 1.1283791
    %v77 = vmul.f32 %v63, %v76
    %v78 = vmul.f32 %v66, 3.8918573e-05
    %v79 = vadd.f32 %v78, 0.001143296
    %v80 = vmul.f32 %v66, %v79
    %v81 = vadd.f32 %v80, 0.014752088
    %v82 = vmul.f32 %v66, %v81
    %v83 = vadd.f32 %v82, 0.112945676
    %v84 = vmul.f32 %v66, %v83
    %v85 = vadd.f32 %v84, 0.4994258
    %v86 = vmul.f32 %v66, %v85
    %v87 = vadd.f32 %v86, 1.0
    %v88 = vrcp.pop %v87
    %v89 = vmul.f32 %v87, %v88
    %v90 = vsub.f32 1.0, %v89
    %v91 = vmul.f32 %v88, %v90
    %v92 = vadd.f32 %v88, %v91
    %vm93 = vweird.f32 %v87
    %vm94 = vweird.f32 %v88
    %vm95 = vmor %vm93, %vm94
    %v96 = vsel %vm95, %v88, %v92
    %v97 = vand.u32 2147483647, %v87
    %vm98 = vcmp.eq.f32.partialorder %v97, 8.507059e+37
    %v99 = vand.u32 %v87, 2147483648
    %v100 = vor.u32 1.1754944e-38, %v99
    %v101 = vsel %vm98, %v100, %v96
    %v102 = vmul.f32 %v77, %v101
    %v103 = vmin.f32 %v102, 1.0
    %v104 = vmax.f32 %v103, -1.0
    %v105 = vmul.f32 %v64, %v64
    %v106 = vmin.f32 16.0, %v105
    %v107 = vmul.f32 %v106, 2.1237322e-06
    %v108 = vadd.f32 %v107, 0.00028619796
    %v109 = vmul.f32 %v106, %v108
    %v110 = vadd.f32 %v109, 0.0036580483
    %v111 = vmul.f32 %v106, %v110
    %v112 = vadd.f32 %v111, 0.05243302
    %v113 = vmul.f32 %v106, %v112
    %v114 = vadd.f32 %v113, 0.18741608
    %v115 = vmul.f32 %v106, %v114
    %v116 = vadd.f32 %v115, 1.1283791
    %v117 = vmul.f32 %v64, %v116
    %v118 = vmul.f32 %v106, 3.8918573e-05
    %v119 = vadd.f32 %v118, 0.001143296
    %v120 = vmul.f32 %v106, %v119
    %v121 = vadd.f32 %v120, 0.014752088
    %v122 = vmul.f32 %v106, %v121
    %v123 = vadd.f32 %v122, 0.112945676
    %v124 = vmul.f32 %v106, %v123
    %v125 = vadd.f32 %v124, 0.4994258
    %v126 = vmul.f32 %v106, %v125
    %v127 = vadd.f32 %v126, 1.0
    %v128 = vrcp.pop %v127
    %v129 = vmul.f32 %v127, %v128
    %v130 = vsub.f32 1.0, %v129
    %v131 = vmul.f32 %v128, %v130
    %v132 = vadd.f32 %v128, %v131
    %vm133 = vweird.f32 %v127
    %vm134 = vweird.f32 %v128
    %vm135 = vmor %vm133, %vm134
    %v136 = vsel %vm135, %v128, %v132
    %v137 = vand.u32 2147483647, %v127
    %vm138 = vcmp.eq.f32.partialorder %v137, 8.507059e+37
    %v139 = vand.u32 %v127, 2147483648
    %v140 = vor.u32 1.1754944e-38, %v139
    %v141 = vsel %vm138, %v140, %v136
    %v142 = vmul.f32 %v117, %v141
    %v143 = vmin.f32 %v142, 1.0
    %v144 = vmax.f32 %v143, -1.0
    %v145 = vadd.f32 %v104, 1.0
    %v146 = vadd.f32 %v144, 1.0
    %v147 = vmul.f32 %v61, %v145
    %v148 = vmul.f32 %v62, %v146
    %v149 = vld [vmem:[%s3] sm:$0xff]
    %v150 = vld [vmem:[%s3 + $0x8] sm:$0xff]
    %v151 = vld [vmem:[%s3 + $0x10] sm:$0xff]
    %v152 = vld [vmem:[%s3 + $0x18] sm:$0xff]
    %v153 = vld [vmem:[%s3 + $0x20] sm:$0xff]
    %v154 = vld [vmem:[%s3 + $0x28] sm:$0xff]
    %v155 = vld [vmem:[%s3 + $0x30] sm:$0xff]
    %v156 = vld [vmem:[%s3 + $0x38] sm:$0xff]
    %v157 = vld [vmem:[%s3 + $0x40] sm:$0xff]
    %v158 = vld [vmem:[%s3 + $0x48] sm:$0xff]
    %v159 = vld [vmem:[%s3 + $0x50] sm:$0xff]
    %v160 = vld [vmem:[%s3 + $0x58] sm:$0xff]
    %v161 = vld [vmem:[%s3 + $0x60] sm:$0xff]
    %v162 = vld [vmem:[%s3 + $0x68] sm:$0xff]
    %v163 = vld [vmem:[%s3 + $0x70] sm:$0xff]
    %v164 = vld [vmem:[%s3 + $0x78] sm:$0xff]
    %v165 = vld [vmem:[%s4] sm:$0x1]
    %v167 = vperm.slane %v165, 0
    %169 = vmatpush.msra.mxu0 %v164
    %170 = vmatpush.msra.mxu0 %v163
    %171 = vmatpush.msra.mxu0 %v162
    %172 = vmatpush.msra.mxu0 %v161
    %173 = vmatpush.msra.mxu0 %v160
    %174 = vmatpush.msra.mxu0 %v159
    %175 = vmatpush.msra.mxu0 %v158
    %176 = vmatpush.msra.mxu0 %v157
    %177 = vmatpush.msra.mxu0 %v156
    %178 = vmatpush.msra.mxu0 %v155
    %179 = vmatpush.msra.mxu0 %v154
    %180 = vmatpush.msra.mxu0 %v153
    %181 = vmatpush.msra.mxu0 %v152
    %182 = vmatpush.msra.mxu0 %v151
    %183 = vmatpush.msra.mxu0 %v150
    %184 = vmatpush.msra.mxu0 %v149
    %185 = vmatmul.f32.gmra.mxu0 %v147
    %v186 = vpop.f32.mrf.mxu0
    %v187 = vadd.f32 %v167, %v186
    %188 = vmatmul.f32.gmra.mxu0 %v148
    %v189 = vpop.f32.mrf.mxu0
    %v190 = vadd.f32 %v167, %v189
    %191 = vdwg.mxu0
    %192 = vst.msk [vmem:[#allocation2] sm:$0xff] %vm31, %v187
    %193 = vst.msk [vmem:[#allocation2 + $0x8] sm:$0xff] %vm31, %v190
    // Predicated region
    $region22: #{tpu_custom_call.1} parent=1 // pred_check
      _
    $region23: #{tpu_custom_call.1} parent=1 // pred_check_branch
      %195 = sbr.rel (0) target = $region25
    $region24: #{tpu_custom_call.1} parent=1 // pred_region
      %197 = vsyncadd [#allocation3], 0
      %s198 = sshll.u32 [#allocation2], 4
      %s199 = int_to_ptr.vmem [resolvable:$true] %s198
      %s200 = sshll.u32 %s5, 4
      %s201 = int_to_ptr.hbm [resolvable:$true] %s200
      %206 = dma.vmem_to_hbm [thread:$0]  %s199, 256, %s201, [#allocation3], 128, 128, 8
    $region25: #{tpu_custom_call.1} parent=1 // pred_fallthru
      _
    // Predicated region
    $region26: #{tpu_custom_call.1} parent=1 // pred_check
      _
    $region27: #{tpu_custom_call.1} parent=1 // pred_check_branch
      %208 = sbr.rel (0) target = $region29
    $region28: #{tpu_custom_call.1} parent=1 // pred_region
      %210 = dma.done [#allocation3], 256
    $region29: #{tpu_custom_call.1} parent=1 // pred_fallthru
      _
    %211 = vsyncpa [#allocation3], 1

</llo_original>
